<compile_context>
chip_gen: v7x
topology: tpu7x:2x2x1
jax: 0.10.0
libtpu: 0.0.40
codegen_flags: <defaults>
</compile_context>

<pallas_src>
import jax
import jax.numpy as jnp
from jax import lax
from jax.experimental import pallas as pl
from jax.experimental.pallas import tpu as pltpu


def _spectral_mul_kernel(xr_ref, xi_ref, wr_ref, wi_ref, or_ref, oi_ref):
    # xr/xi : (1, Cin, tm)    split real / imag activations for one batch item
    # wr/wi : (Cin, tco, tm)  split real / imag weights
    # or/oi : (1, tco, tm)    split real / imag outputs
    cin, tco, tm = wr_ref.shape

    def body(i, carry):
        acc_r, acc_i = carry
        xr = xr_ref[0, pl.ds(i, 1), :]          # (1, tm) — broadcast over tco sublanes
        xi = xi_ref[0, pl.ds(i, 1), :]          # (1, tm)
        wr = wr_ref[i]                          # (tco, tm)
        wi = wi_ref[i]                          # (tco, tm)
        acc_r = acc_r + (xr * wr - xi * wi)
        acc_i = acc_i + (xr * wi + xi * wr)
        return acc_r, acc_i

    acc0 = (jnp.zeros((tco, tm), jnp.float32),
            jnp.zeros((tco, tm), jnp.float32))
    unroll = True if cin <= 8 else 4
    acc_r, acc_i = lax.fori_loop(0, cin, body, acc0, unroll=unroll)
    or_ref[0, :, :] = acc_r
    oi_ref[0, :, :] = acc_i


def _pick_tiles(out_channels, n_modes):
    """Choose (cout_pad, tco, m_pad, tm) for the spectral channel contraction."""
    # Pad Cout to a multiple of 8 so VPU ops and stores stay full-width.
    cout_pad = ((out_channels + 7) // 8) * 8
    if cout_pad <= 32:
        tco = cout_pad                    # co grid axis disappears entirely
    else:
        tco = next(t for t in (32, 24, 16, 8) if cout_pad % t == 0)
    # Lane tile: multiple of 128, as large as possible while the two f32
    # accumulators stay <= ~128 KiB (~32 vregs, no spill): tco * tm <= 16384.
    budget = max(128, (16384 // tco) // 128 * 128)
    m_min = ((n_modes + 127) // 128) * 128
    if m_min <= budget:
        tm = m_pad = m_min                # single lane tile, minimal padding
    else:
        tm = budget
        m_pad = ((n_modes + tm - 1) // tm) * tm   # pad modes to a tile multiple
    return cout_pad, tco, m_pad, tm


def _vmem_limit_bytes(cin, tco, tm):
    # 2 planes (re/im) x 2 pipeline buffers per stream, f32.
    blk_x = cin * tm * 4
    blk_w = cin * tco * tm * 4
    blk_o = tco * tm * 4
    need = 2 * 2 * (blk_x + blk_w + blk_o)
    # Headroom for internal scratch; 48 MiB ceiling is safe on every
    # generation (v7x has 64 MiB physical VMEM, v5e/v6e have 128 MiB).
    return min(max(need + (4 << 20), 16 << 20), 48 << 20)


def _spectral_mul(xr, xi, wr, wi, tco, tm):
    """out[b,o,m] = sum_i x[b,i,m] * w[i,o,m] (complex), on split f32 planes."""
    B, Cin, Mp = xr.shape
    Cout_p = wr.shape[1]
    assert Cout_p % tco == 0 and Mp % tm == 0
    # b innermost and "arbitrary": weight tiles (index_maps independent of b)
    # stay VMEM-resident across the whole batch; any megacore split lands on
    # the co / mi axes so each core streams only its share of the weights.
    grid = (Cout_p // tco, Mp // tm, B)

    x_spec = pl.BlockSpec((1, Cin, tm), lambda co, mi, b: (b, 0, mi))
    w_spec = pl.BlockSpec((Cin, tco, tm), lambda co, mi, b: (0, co, mi))
    o_spec = pl.BlockSpec((1, tco, tm), lambda co, mi, b: (b, co, mi))

    out_shape = (jax.ShapeDtypeStruct((B, Cout_p, Mp), jnp.float32),
                 jax.ShapeDtypeStruct((B, Cout_p, Mp), jnp.float32))
    return pl.pallas_call(
        _spectral_mul_kernel,
        out_shape=out_shape,
        grid=grid,
        in_specs=[x_spec, x_spec, w_spec, w_spec],
        out_specs=(o_spec, o_spec),
        compiler_params=pltpu.CompilerParams(
            dimension_semantics=("parallel", "parallel", "arbitrary"),
            vmem_limit_bytes=_vmem_limit_bytes(Cin, tco, tm),
        ),
    )(xr, xi, wr, wi)


class SpectralConv2d:
    """JAX/Pallas port of the PyTorch SpectralConv2d module."""

    def __init__(self, in_channels, out_channels, modes1, modes2, key):
        self.in_channels = in_channels
        self.out_channels = out_channels
        self.modes1 = modes1
        self.modes2 = modes2
        scale = 1.0 / (in_channels * out_channels)
        k1r, k1i, k2r, k2i = jax.random.split(key, 4)
        shp = (in_channels, out_channels, modes1, modes2)
        # Matches torch.rand(..., dtype=torch.cfloat): U[0,1) real and imag parts.
        self.weights1 = (scale * (jax.random.uniform(k1r, shp, jnp.float32)
                                  + 1j * jax.random.uniform(k1i, shp, jnp.float32))
                         ).astype(jnp.complex64)
        self.weights2 = (scale * (jax.random.uniform(k2r, shp, jnp.float32)
                                  + 1j * jax.random.uniform(k2i, shp, jnp.float32))
                         ).astype(jnp.complex64)

        # Precompute split / padded weight planes once (not per forward call):
        # both retained corner blocks flattened to one lane axis M = 2*m1*m2,
        # zero-padded to a lane-dense tile multiple, and the output-channel
        # axis zero-padded to a multiple of 8 (full-width vregs / stores).
        m = modes1 * modes2
        self._m = 2 * m
        (self._cout_pad, self._tco, self._m_pad, self._tm) = _pick_tiles(
            out_channels, self._m)
        w_modes = jnp.concatenate(
            [self.weights1.reshape(in_channels, out_channels, m),
             self.weights2.reshape(in_channels, out_channels, m)], axis=-1)
        w_modes = jnp.pad(
            w_modes, ((0, 0),
                      (0, self._cout_pad - out_channels),
                      (0, self._m_pad - self._m)))
        self._wr = jnp.real(w_modes).astype(jnp.float32)
        self._wi = jnp.imag(w_modes).astype(jnp.float32)

    def __call__(self, x):
        B, Cin, H, W = x.shape
        m1, m2 = self.modes1, self.modes2
        Cout = self.out_channels
        Wf = W // 2 + 1
        m = m1 * m2

        # TODO(synk): FFT / iFFT have no Pallas TPU primitive; done in plain JAX (glue).
        x_ft = jnp.fft.rfft2(x)                                  # (B, Cin, H, Wf) complex64

        # Gather the two retained corner blocks, flatten and pad their modes.
        top = x_ft[:, :, :m1, :m2].reshape(B, Cin, m)
        bot = x_ft[:, :, H - m1:, :m2].reshape(B, Cin, m)
        x_modes = jnp.concatenate([top, bot], axis=-1)           # (B, Cin, M)
        x_modes = jnp.pad(x_modes, ((0, 0), (0, 0), (0, self._m_pad - self._m)))
        xr = jnp.real(x_modes).astype(jnp.float32)
        xi = jnp.imag(x_modes).astype(jnp.float32)

        out_r, out_i = _spectral_mul(xr, xi, self._wr, self._wi,
                                     self._tco, self._tm)

        out_modes = (out_r[:, :Cout, :self._m]
                     + 1j * out_i[:, :Cout, :self._m]).astype(jnp.complex64)
        out1 = out_modes[:, :, :m].reshape(B, Cout, m1, m2)
        out2 = out_modes[:, :, m:].reshape(B, Cout, m1, m2)

        out_ft = jnp.zeros((B, Cout, H, Wf), jnp.complex64)
        out_ft = out_ft.at[:, :, :m1, :m2].set(out1)
        out_ft = out_ft.at[:, :, H - m1:, :m2].set(out2)

        return jnp.fft.irfft2(out_ft, s=(H, W))                  # (B, Cout, H, W) float32


def _reference_forward(x, weights1, weights2, modes1, modes2):
    """Pure-JAX reference mirroring the PyTorch forward exactly."""
    B, Cin, H, W = x.shape
    Cout = weights1.shape[1]
    x_ft = jnp.fft.rfft2(x)
    out_ft = jnp.zeros((B, Cout, H, W // 2 + 1), jnp.complex64)
    blk1 = jnp.einsum('bixy,ioxy->boxy', x_ft[:, :, :modes1, :modes2], weights1)
    blk2 = jnp.einsum('bixy,ioxy->boxy', x_ft[:, :, H - modes1:, :modes2], weights2)
    out_ft = out_ft.at[:, :, :modes1, :modes2].set(blk1)
    out_ft = out_ft.at[:, :, H - modes1:, :modes2].set(blk2)
    return jnp.fft.irfft2(out_ft, s=(H, W))


if __name__ == "__main__":
    key = jax.random.PRNGKey(0)
    kx1, kw1, kx2, kw2 = jax.random.split(key, 4)

    # Case 1: the module's example shapes.
    B, Cin, Cout, H, W = 2, 4, 4, 16, 16
    modes1, modes2 = 4, 4
    x = jax.random.normal(kx1, (B, Cin, H, W), dtype=jnp.float32)
    layer = SpectralConv2d(Cin, Cout, modes1, modes2, kw1)
    out = jax.block_until_ready(layer(x))
    ref = jax.block_until_ready(
        _reference_forward(x, layer.weights1, layer.weights2, modes1, modes2))
    assert out.shape == (B, Cout, H, W), out.shape
    assert out.dtype == jnp.float32, out.dtype
    err = float(jnp.max(jnp.abs(out - ref)))
    assert jnp.allclose(out, ref, atol=2e-5, rtol=2e-5), err

    # Case 2: Cout not a multiple of 8 (exercises channel padding) and
    # Cin > 8 (exercises the partially-unrolled contraction loop).
    B2, Cin2, Cout2, H2, W2 = 2, 12, 6, 32, 32
    m1b, m2b = 6, 6
    x2 = jax.random.normal(kx2, (B2, Cin2, H2, W2), dtype=jnp.float32)
    layer2 = SpectralConv2d(Cin2, Cout2, m1b, m2b, kw2)
    out2 = jax.block_until_ready(layer2(x2))
    ref2 = jax.block_until_ready(
        _reference_forward(x2, layer2.weights1, layer2.weights2, m1b, m2b))
    assert out2.shape == (B2, Cout2, H2, W2), out2.shape
    err2 = float(jnp.max(jnp.abs(out2 - ref2)))
    assert jnp.allclose(out2, ref2, atol=2e-5, rtol=2e-5), err2

    print("KERNEL_OK")
</pallas_src>

<mosaic_0001>
module attributes {stable_mosaic.version = 11 : i64} {
  func.func @_spectral_mul_kernel(%arg0: i32, %arg1: i32, %arg2: i32, %arg3: memref<1x4x128xf32, #tpu.memory_space<vmem>>, %arg4: memref<1x4x128xf32, #tpu.memory_space<vmem>>, %arg5: memref<4x8x128xf32, #tpu.memory_space<vmem>>, %arg6: memref<4x8x128xf32, #tpu.memory_space<vmem>>, %arg7: memref<1x8x128xf32, #tpu.memory_space<vmem>>, %arg8: memref<1x8x128xf32, #tpu.memory_space<vmem>>) attributes {dimension_semantics = [#tpu.dimension_semantics<parallel>, #tpu.dimension_semantics<parallel>, #tpu.dimension_semantics<arbitrary>], iteration_bounds = array<i64: 1, 1, 2>, scalar_prefetch = 0 : i64, scratch_operands = 0 : i64, tpu.core_type = #tpu.core_type<tc>, window_params = [{transform_indices = @transform_0, window_bounds = array<i64: 1, 4, 128>}, {transform_indices = @transform_1, window_bounds = array<i64: 1, 4, 128>}, {transform_indices = @transform_2, window_bounds = array<i64: 4, 8, 128>}, {transform_indices = @transform_3, window_bounds = array<i64: 4, 8, 128>}, {transform_indices = @transform_4, window_bounds = array<i64: 1, 8, 128>}, {transform_indices = @transform_5, window_bounds = array<i64: 1, 8, 128>}]} {
    %cst = arith.constant 0.000000e+00 : f32
    %0 = vector.broadcast %cst : f32 to vector<8x128xf32>
    %cst_0 = arith.constant 0.000000e+00 : f32
    %1 = vector.broadcast %cst_0 : f32 to vector<8x128xf32>
    %c0_i32 = arith.constant 0 : i32
    %c0 = arith.constant 0 : index
    %2 = arith.index_cast %c0_i32 : i32 to index
    %c0_1 = arith.constant 0 : index
    %3 = vector.load %arg3[%c0, %2, %c0_1] : memref<1x4x128xf32, #tpu.memory_space<vmem>>, vector<1x1x128xf32>
    %4 = vector.shape_cast %3 : vector<1x1x128xf32> to vector<1x128xf32>
    %c0_2 = arith.constant 0 : index
    %5 = arith.index_cast %c0_i32 : i32 to index
    %c0_3 = arith.constant 0 : index
    %6 = vector.load %arg4[%c0_2, %5, %c0_3] : memref<1x4x128xf32, #tpu.memory_space<vmem>>, vector<1x1x128xf32>
    %7 = vector.shape_cast %6 : vector<1x1x128xf32> to vector<1x128xf32>
    %8 = arith.index_cast %c0_i32 : i32 to index
    %c0_4 = arith.constant 0 : index
    %c0_5 = arith.constant 0 : index
    %9 = vector.load %arg5[%8, %c0_4, %c0_5] : memref<4x8x128xf32, #tpu.memory_space<vmem>>, vector<1x8x128xf32>
    %10 = vector.shape_cast %9 : vector<1x8x128xf32> to vector<8x128xf32>
    %11 = arith.index_cast %c0_i32 : i32 to index
    %c0_6 = arith.constant 0 : index
    %c0_7 = arith.constant 0 : index
    %12 = vector.load %arg6[%11, %c0_6, %c0_7] : memref<4x8x128xf32, #tpu.memory_space<vmem>>, vector<1x8x128xf32>
    %13 = vector.shape_cast %12 : vector<1x8x128xf32> to vector<8x128xf32>
    %14 = vector.broadcast %4 : vector<1x128xf32> to vector<8x128xf32>
    %15 = arith.mulf %14, %10 : vector<8x128xf32>
    %16 = vector.broadcast %7 : vector<1x128xf32> to vector<8x128xf32>
    %17 = arith.mulf %16, %13 : vector<8x128xf32>
    %18 = arith.subf %15, %17 : vector<8x128xf32>
    %19 = arith.addf %0, %18 : vector<8x128xf32>
    %20 = vector.broadcast %4 : vector<1x128xf32> to vector<8x128xf32>
    %21 = arith.mulf %20, %13 : vector<8x128xf32>
    %22 = vector.broadcast %7 : vector<1x128xf32> to vector<8x128xf32>
    %23 = arith.mulf %22, %10 : vector<8x128xf32>
    %24 = arith.addf %21, %23 : vector<8x128xf32>
    %25 = arith.addf %1, %24 : vector<8x128xf32>
    %c1_i32 = arith.constant 1 : i32
    %c0_8 = arith.constant 0 : index
    %26 = arith.index_cast %c1_i32 : i32 to index
    %c0_9 = arith.constant 0 : index
    %27 = vector.load %arg3[%c0_8, %26, %c0_9] : memref<1x4x128xf32, #tpu.memory_space<vmem>>, vector<1x1x128xf32>
    %28 = vector.shape_cast %27 : vector<1x1x128xf32> to vector<1x128xf32>
    %c0_10 = arith.constant 0 : index
    %29 = arith.index_cast %c1_i32 : i32 to index
    %c0_11 = arith.constant 0 : index
    %30 = vector.load %arg4[%c0_10, %29, %c0_11] : memref<1x4x128xf32, #tpu.memory_space<vmem>>, vector<1x1x128xf32>
    %31 = vector.shape_cast %30 : vector<1x1x128xf32> to vector<1x128xf32>
    %32 = arith.index_cast %c1_i32 : i32 to index
    %c0_12 = arith.constant 0 : index
    %c0_13 = arith.constant 0 : index
    %33 = vector.load %arg5[%32, %c0_12, %c0_13] : memref<4x8x128xf32, #tpu.memory_space<vmem>>, vector<1x8x128xf32>
    %34 = vector.shape_cast %33 : vector<1x8x128xf32> to vector<8x128xf32>
    %35 = arith.index_cast %c1_i32 : i32 to index
    %c0_14 = arith.constant 0 : index
    %c0_15 = arith.constant 0 : index
    %36 = vector.load %arg6[%35, %c0_14, %c0_15] : memref<4x8x128xf32, #tpu.memory_space<vmem>>, vector<1x8x128xf32>
    %37 = vector.shape_cast %36 : vector<1x8x128xf32> to vector<8x128xf32>
    %38 = vector.broadcast %28 : vector<1x128xf32> to vector<8x128xf32>
    %39 = arith.mulf %38, %34 : vector<8x128xf32>
    %40 = vector.broadcast %31 : vector<1x128xf32> to vector<8x128xf32>
    %41 = arith.mulf %40, %37 : vector<8x128xf32>
    %42 = arith.subf %39, %41 : vector<8x128xf32>
    %43 = arith.addf %19, %42 : vector<8x128xf32>
    %44 = vector.broadcast %28 : vector<1x128xf32> to vector<8x128xf32>
    %45 = arith.mulf %44, %37 : vector<8x128xf32>
    %46 = vector.broadcast %31 : vector<1x128xf32> to vector<8x128xf32>
    %47 = arith.mulf %46, %34 : vector<8x128xf32>
    %48 = arith.addf %45, %47 : vector<8x128xf32>
    %49 = arith.addf %25, %48 : vector<8x128xf32>
    %c2_i32 = arith.constant 2 : i32
    %c0_16 = arith.constant 0 : index
    %50 = arith.index_cast %c2_i32 : i32 to index
    %c0_17 = arith.constant 0 : index
    %51 = vector.load %arg3[%c0_16, %50, %c0_17] : memref<1x4x128xf32, #tpu.memory_space<vmem>>, vector<1x1x128xf32>
    %52 = vector.shape_cast %51 : vector<1x1x128xf32> to vector<1x128xf32>
    %c0_18 = arith.constant 0 : index
    %53 = arith.index_cast %c2_i32 : i32 to index
    %c0_19 = arith.constant 0 : index
    %54 = vector.load %arg4[%c0_18, %53, %c0_19] : memref<1x4x128xf32, #tpu.memory_space<vmem>>, vector<1x1x128xf32>
    %55 = vector.shape_cast %54 : vector<1x1x128xf32> to vector<1x128xf32>
    %56 = arith.index_cast %c2_i32 : i32 to index
    %c0_20 = arith.constant 0 : index
    %c0_21 = arith.constant 0 : index
    %57 = vector.load %arg5[%56, %c0_20, %c0_21] : memref<4x8x128xf32, #tpu.memory_space<vmem>>, vector<1x8x128xf32>
    %58 = vector.shape_cast %57 : vector<1x8x128xf32> to vector<8x128xf32>
    %59 = arith.index_cast %c2_i32 : i32 to index
    %c0_22 = arith.constant 0 : index
    %c0_23 = arith.constant 0 : index
    %60 = vector.load %arg6[%59, %c0_22, %c0_23] : memref<4x8x128xf32, #tpu.memory_space<vmem>>, vector<1x8x128xf32>
    %61 = vector.shape_cast %60 : vector<1x8x128xf32> to vector<8x128xf32>
    %62 = vector.broadcast %52 : vector<1x128xf32> to vector<8x128xf32>
    %63 = arith.mulf %62, %58 : vector<8x128xf32>
    %64 = vector.broadcast %55 : vector<1x128xf32> to vector<8x128xf32>
    %65 = arith.mulf %64, %61 : vector<8x128xf32>
    %66 = arith.subf %63, %65 : vector<8x128xf32>
    %67 = arith.addf %43, %66 : vector<8x128xf32>
    %68 = vector.broadcast %52 : vector<1x128xf32> to vector<8x128xf32>
    %69 = arith.mulf %68, %61 : vector<8x128xf32>
    %70 = vector.broadcast %55 : vector<1x128xf32> to vector<8x128xf32>
    %71 = arith.mulf %70, %58 : vector<8x128xf32>
    %72 = arith.addf %69, %71 : vector<8x128xf32>
    %73 = arith.addf %49, %72 : vector<8x128xf32>
    %c3_i32 = arith.constant 3 : i32
    %c0_24 = arith.constant 0 : index
    %74 = arith.index_cast %c3_i32 : i32 to index
    %c0_25 = arith.constant 0 : index
    %75 = vector.load %arg3[%c0_24, %74, %c0_25] : memref<1x4x128xf32, #tpu.memory_space<vmem>>, vector<1x1x128xf32>
    %76 = vector.shape_cast %75 : vector<1x1x128xf32> to vector<1x128xf32>
    %c0_26 = arith.constant 0 : index
    %77 = arith.index_cast %c3_i32 : i32 to index
    %c0_27 = arith.constant 0 : index
    %78 = vector.load %arg4[%c0_26, %77, %c0_27] : memref<1x4x128xf32, #tpu.memory_space<vmem>>, vector<1x1x128xf32>
    %79 = vector.shape_cast %78 : vector<1x1x128xf32> to vector<1x128xf32>
    %80 = arith.index_cast %c3_i32 : i32 to index
    %c0_28 = arith.constant 0 : index
    %c0_29 = arith.constant 0 : index
    %81 = vector.load %arg5[%80, %c0_28, %c0_29] : memref<4x8x128xf32, #tpu.memory_space<vmem>>, vector<1x8x128xf32>
    %82 = vector.shape_cast %81 : vector<1x8x128xf32> to vector<8x128xf32>
    %83 = arith.index_cast %c3_i32 : i32 to index
    %c0_30 = arith.constant 0 : index
    %c0_31 = arith.constant 0 : index
    %84 = vector.load %arg6[%83, %c0_30, %c0_31] : memref<4x8x128xf32, #tpu.memory_space<vmem>>, vector<1x8x128xf32>
    %85 = vector.shape_cast %84 : vector<1x8x128xf32> to vector<8x128xf32>
    %86 = vector.broadcast %76 : vector<1x128xf32> to vector<8x128xf32>
    %87 = arith.mulf %86, %82 : vector<8x128xf32>
    %88 = vector.broadcast %79 : vector<1x128xf32> to vector<8x128xf32>
    %89 = arith.mulf %88, %85 : vector<8x128xf32>
    %90 = arith.subf %87, %89 : vector<8x128xf32>
    %91 = arith.addf %67, %90 : vector<8x128xf32>
    %92 = vector.broadcast %76 : vector<1x128xf32> to vector<8x128xf32>
    %93 = arith.mulf %92, %85 : vector<8x128xf32>
    %94 = vector.broadcast %79 : vector<1x128xf32> to vector<8x128xf32>
    %95 = arith.mulf %94, %82 : vector<8x128xf32>
    %96 = arith.addf %93, %95 : vector<8x128xf32>
    %97 = arith.addf %73, %96 : vector<8x128xf32>
    %c4_i32 = arith.constant 4 : i32
    %c0_32 = arith.constant 0 : index
    %c0_33 = arith.constant 0 : index
    %c0_34 = arith.constant 0 : index
    %98 = vector.load %arg7[%c0_32, %c0_33, %c0_34] : memref<1x8x128xf32, #tpu.memory_space<vmem>>, vector<1x8x128xf32>
    %99 = vector.shape_cast %98 : vector<1x8x128xf32> to vector<8x128xf32>
    %100 = vector.shape_cast %91 : vector<8x128xf32> to vector<1x8x128xf32>
    tpu.vector_store %arg7[%c0_32, %c0_33, %c0_34], %100 {strides = array<i32>} : memref<1x8x128xf32, #tpu.memory_space<vmem>>, vector<1x8x128xf32>,
    %c0_35 = arith.constant 0 : index
    %c0_36 = arith.constant 0 : index
    %c0_37 = arith.constant 0 : index
    %101 = vector.load %arg8[%c0_35, %c0_36, %c0_37] : memref<1x8x128xf32, #tpu.memory_space<vmem>>, vector<1x8x128xf32>
    %102 = vector.shape_cast %101 : vector<1x8x128xf32> to vector<8x128xf32>
    %103 = vector.shape_cast %97 : vector<8x128xf32> to vector<1x8x128xf32>
    tpu.vector_store %arg8[%c0_35, %c0_36, %c0_37], %103 {strides = array<i32>} : memref<1x8x128xf32, #tpu.memory_space<vmem>>, vector<1x8x128xf32>,
    return
  }
  func.func @transform_0(%arg0: i32, %arg1: i32, %arg2: i32) -> (i32, i32, i32) {
    %c0_i32 = arith.constant 0 : i32
    %c0_i32_0 = arith.constant 0 : i32
    return %arg2, %c0_i32, %arg1 : i32, i32, i32
  }
  func.func @transform_1(%arg0: i32, %arg1: i32, %arg2: i32) -> (i32, i32, i32) {
    %c0_i32 = arith.constant 0 : i32
    %c0_i32_0 = arith.constant 0 : i32
    return %arg2, %c0_i32, %arg1 : i32, i32, i32
  }
  func.func @transform_2(%arg0: i32, %arg1: i32, %arg2: i32) -> (i32, i32, i32) {
    %c0_i32 = arith.constant 0 : i32
    %c0_i32_0 = arith.constant 0 : i32
    return %c0_i32, %arg0, %arg1 : i32, i32, i32
  }
  func.func @transform_3(%arg0: i32, %arg1: i32, %arg2: i32) -> (i32, i32, i32) {
    %c0_i32 = arith.constant 0 : i32
    %c0_i32_0 = arith.constant 0 : i32
    return %c0_i32, %arg0, %arg1 : i32, i32, i32
  }
  func.func @transform_4(%arg0: i32, %arg1: i32, %arg2: i32) -> (i32, i32, i32) {
    %c0_i32 = arith.constant 0 : i32
    return %arg2, %arg0, %arg1 : i32, i32, i32
  }
  func.func @transform_5(%arg0: i32, %arg1: i32, %arg2: i32) -> (i32, i32, i32) {
    %c0_i32 = arith.constant 0 : i32
    return %arg2, %arg0, %arg1 : i32, i32, i32
  }
}

</mosaic_0001>

<llo_original>
// kernel: tpu_custom_call.1
$region0: #{tpu_custom_call.1}
  #allocation0 [shape = 'u32[]', space=smem, size = 0x4, offset = 0x4, fixed_abs, tag = 'smem constant byte address 0x4 - core index']
  #allocation1 [shape = 'u32[144,128]{1,0:T(1,128)}', space=vmem, size = 0x12000, scoped, tag = 'internal scratch']
  %s0 = inlined_call_operand.hbm [shape: f32[2,4,128], index: 0, kind: input, shape index: {}]
  %s1 = inlined_call_operand.hbm [shape: f32[2,4,128], index: 1, kind: input, shape index: {}]
  %s2 = inlined_call_operand.hbm [shape: f32[4,8,128], index: 2, kind: input, shape index: {}]
  %s3 = inlined_call_operand.hbm [shape: f32[4,8,128], index: 3, kind: input, shape index: {}]
  %s4 = inlined_call_operand.hbm [shape: f32[2,8,128], index: 4, kind: output, shape index: {0}]
  %s5 = inlined_call_operand.hbm [shape: f32[2,8,128], index: 5, kind: output, shape index: {1}]
  %6 = xla_tuple %s4, %s5
  %s7 = sld [smem:[#allocation0]]
  $region73: #{tpu_custom_call.1} parent=0
    _
  %s9 = ssub.s32 1, %s7
  %s10 = scalar_select 0, %s9, %s7
  $region1: #{tpu_custom_call.1} parent=0
    #allocation2 [shape = 'u8[4096]{0}', space=vmem, size = 0x1000, scoped, tag = 'input window, operand 0']
    #allocation3 [shape = 's32[2]{0}', space=sflag, size = 0x8, scoped, tag = 'scoped memory for tpu_custom_call.1']
    #allocation4 [shape = 's32[2]{0}', space=sflag, size = 0x8, scoped, tag = 'scoped memory for tpu_custom_call.1']
    #allocation5 [shape = 'u8[4096]{0}', space=vmem, size = 0x1000, scoped, tag = 'input window, operand 1']
    #allocation6 [shape = 's32[2]{0}', space=sflag, size = 0x8, scoped, tag = 'scoped memory for tpu_custom_call.1']
    #allocation7 [shape = 'u8[16384]{0}', space=vmem, size = 0x4000, scoped, tag = 'input window, operand 2, single buffered']
    #allocation8 [shape = 'u8[16384]{0}', space=vmem, size = 0x4000, scoped, tag = 'input window, operand 3, single buffered']
    #allocation9 [shape = 's32[1]{0}', space=sflag, size = 0x4, scoped, tag = 'scoped memory for tpu_custom_call.1']
    #allocation10 [shape = 'u8[8192]{0}', space=vmem, size = 0x2000, scoped, tag = 'output window, operand 0']
    #allocation11 [shape = 'u8[8192]{0}', space=vmem, size = 0x2000, scoped, tag = 'output window, operand 1']
    #allocation12 [shape = 's32[2]{0}', space=sflag, size = 0x8, scoped, tag = 'scoped memory for tpu_custom_call.1']
    %11 = vsyncpa [#allocation3], 0
    %s12 = scalar_lea.sflag [#allocation3], 1
    %13 = vsyncpa %s12, 0
    %14 = vsyncpa [#allocation6], 0
    %s15 = scalar_lea.sflag [#allocation6], 1
    %16 = vsyncpa %s15, 0
    %17 = vsyncpa [#allocation9], 0
    %18 = vsyncpa [#allocation4], 0
    %s19 = scalar_lea.sflag [#allocation4], 1
    %20 = vsyncpa %s19, 0
    %21 = vsyncpa [#allocation12], 0
    %s22 = scalar_lea.sflag [#allocation12], 1
    %23 = vsyncpa %s22, 0
    loop: start=0, step=1, limit=4
    $region2: #{tpu_custom_call.1} parent=1 // loop_pre_header
      _
    $region3: #{tpu_custom_call.1} parent=1 // loop_header
      %s25 = sphi 0, %s29
      %p26 = scmp.ge.s32.totalorder %s25, 4
      %s32 = sphi 0, %s51
      %s33 = sphi 0, %s47
      %s34 = sphi 0, %s43
      %s35 = sphi 0, %s32
      %s36 = sphi 0, %s33
      %s37 = sphi 0, %s34
      %s38 = sphi 0, %s35
      %s39 = sphi 0, %s36
      %s40 = sphi 0, %s37
      %s56 = sphi 0, %s58
      %s59 = sphi 0, %s56
      %s60 = sphi 0, %s59
      %s76 = sphi 0, %s60
      %s84 = sphi 0, %s86
      %s87 = sphi 0, %s84
      %s88 = sphi 0, %s87
      %s104 = sphi 0, %s88
      %s112 = sphi 0, %s114
      %s115 = sphi 0, %s112
      %s116 = sphi 0, %s115
      %s132 = sphi 0, %s116
      %s140 = sphi 0, %s142
      %s143 = sphi 0, %s140
      %s144 = sphi 0, %s143
      %s160 = sphi 0, %s144
      %s170 = sphi 0, %s172
      %s173 = sphi 0, %s170
      %s174 = sphi 0, %s173
      %s190 = sphi 0, %s174
      %s200 = sphi 0, %s202
      %s203 = sphi 0, %s200
      %s204 = sphi 0, %s203
      %s220 = sphi 0, %s204
    $region4: #{tpu_custom_call.1} parent=1 // loop_header_branch
      %28 = sbr.rel (%p26) target = $region8
    $region5: #{tpu_custom_call.1} parent=1 // loop_body
      %s30 = ssub.s32 %s25, 1
      %s31 = ssub.s32 %s25, 2
      %s41 = sadd.s32 1, %s34
      %p42 = scmp.ge.s32.totalorder %s41, 2
      %s43 = scalar_select %p42, 0, %s41
      %s44 = sadd.s32 1, %s33
      %s45 = scalar_select %p42, %s44, %s33
      %p46 = scmp.ge.s32.totalorder %s45, 1
      %s47 = scalar_select %p46, 0, %s45
      %s48 = sadd.s32 1, %s32
      %s49 = scalar_select %p46, %s48, %s32
      %p50 = scmp.ge.s32.totalorder %s49, 1
      %s51 = scalar_select %p50, 0, %s49
      %s52 = ssub.s32 %s34, %s43
      %s53 = ssub.s32 %s33, %s47
      %s54 = sor.u32 %s52, %s53
      %p55 = scmp.eq.s32.totalorder %s54, 0
      %s57 = sadd.s32 %s56, 1
      %s58 = scalar_select %p55, %s56, %s57
      %p61 = pneg %p55
      %p62 = scmp.eq.s32.totalorder %s25, 1
      %p63 = por %p61, %p62
      %p64 = scmp.ne.s32.totalorder %s56, %s59
      %p65 = scmp.eq.s32.totalorder %s25, 0
      %p66 = por %p64, %p65
      %p67 = scmp.ne.s32.totalorder %s56, %s59
      %p68 = scmp.eq.s32.totalorder %s30, 1
      %p69 = por %p67, %p68
      %p70 = scmp.ne.s32.totalorder %s59, %s60
      %p71 = scmp.eq.s32.totalorder %s30, 0
      %p72 = por %p70, %p71
      %p73 = scmp.ne.s32.totalorder %s59, %s60
      %p74 = scmp.eq.s32.totalorder %s31, 1
      %p75 = por %p73, %p74
      %p77 = scmp.ne.s32.totalorder %s60, %s76
      %p78 = scmp.eq.s32.totalorder %s31, 0
      %p79 = por %p77, %p78
      %s80 = ssub.s32 %s34, %s43
      %s81 = ssub.s32 %s33, %s47
      %s82 = sor.u32 %s80, %s81
      %p83 = scmp.eq.s32.totalorder %s82, 0
      %s85 = sadd.s32 %s84, 1
      %s86 = scalar_select %p83, %s84, %s85
      %p89 = pneg %p83
      %p90 = scmp.eq.s32.totalorder %s25, 1
      %p91 = por %p89, %p90
      %p92 = scmp.ne.s32.totalorder %s84, %s87
      %p93 = scmp.eq.s32.totalorder %s25, 0
      %p94 = por %p92, %p93
      %p95 = scmp.ne.s32.totalorder %s84, %s87
      %p96 = scmp.eq.s32.totalorder %s30, 1
      %p97 = por %p95, %p96
      %p98 = scmp.ne.s32.totalorder %s87, %s88
      %p99 = scmp.eq.s32.totalorder %s30, 0
      %p100 = por %p98, %p99
      %p101 = scmp.ne.s32.totalorder %s87, %s88
      %p102 = scmp.eq.s32.totalorder %s31, 1
      %p103 = por %p101, %p102
      %p105 = scmp.ne.s32.totalorder %s88, %s104
      %p106 = scmp.eq.s32.totalorder %s31, 0
      %p107 = por %p105, %p106
      %s108 = ssub.s32 %s32, %s51
      %s109 = ssub.s32 %s33, %s47
      %s110 = sor.u32 %s108, %s109
      %p111 = scmp.eq.s32.totalorder %s110, 0
      %s113 = sadd.s32 %s112, 1
      %s114 = scalar_select %p111, %s112, %s113
      %p117 = pneg %p111
      %p118 = scmp.eq.s32.totalorder %s25, 1
      %p119 = por %p117, %p118
      %p120 = scmp.ne.s32.totalorder %s112, %s115
      %p121 = scmp.eq.s32.totalorder %s25, 0
      %p122 = por %p120, %p121
      %p123 = scmp.ne.s32.totalorder %s112, %s115
      %p124 = scmp.eq.s32.totalorder %s30, 1
      %p125 = por %p123, %p124
      %p126 = scmp.ne.s32.totalorder %s115, %s116
      %p127 = scmp.eq.s32.totalorder %s30, 0
      %p128 = por %p126, %p127
      %p129 = scmp.ne.s32.totalorder %s115, %s116
      %p130 = scmp.eq.s32.totalorder %s31, 1
      %p131 = por %p129, %p130
      %p133 = scmp.ne.s32.totalorder %s116, %s132
      %p134 = scmp.eq.s32.totalorder %s31, 0
      %p135 = por %p133, %p134
      %s136 = ssub.s32 %s32, %s51
      %s137 = ssub.s32 %s33, %s47
      %s138 = sor.u32 %s136, %s137
      %p139 = scmp.eq.s32.totalorder %s138, 0
      %s141 = sadd.s32 %s140, 1
      %s142 = scalar_select %p139, %s140, %s141
      %p145 = pneg %p139
      %p146 = scmp.eq.s32.totalorder %s25, 1
      %p147 = por %p145, %p146
      %p148 = scmp.ne.s32.totalorder %s140, %s143
      %p149 = scmp.eq.s32.totalorder %s25, 0
      %p150 = por %p148, %p149
      %p151 = scmp.ne.s32.totalorder %s140, %s143
      %p152 = scmp.eq.s32.totalorder %s30, 1
      %p153 = por %p151, %p152
      %p154 = scmp.ne.s32.totalorder %s143, %s144
      %p155 = scmp.eq.s32.totalorder %s30, 0
      %p156 = por %p154, %p155
      %p157 = scmp.ne.s32.totalorder %s143, %s144
      %p158 = scmp.eq.s32.totalorder %s31, 1
      %p159 = por %p157, %p158
      %p161 = scmp.ne.s32.totalorder %s144, %s160
      %p162 = scmp.eq.s32.totalorder %s31, 0
      %p163 = por %p161, %p162
      %s164 = ssub.s32 %s34, %s43
      %s165 = ssub.s32 %s32, %s51
      %s166 = sor.u32 %s164, %s165
      %s167 = ssub.s32 %s33, %s47
      %s168 = sor.u32 %s166, %s167
      %p169 = scmp.eq.s32.totalorder %s168, 0
      %s171 = sadd.s32 %s170, 1
      %s172 = scalar_select %p169, %s170, %s171
      %p175 = pneg %p169
      %p176 = scmp.eq.s32.totalorder %s25, 1
      %p177 = por %p175, %p176
      %p178 = scmp.ne.s32.totalorder %s170, %s173
      %p179 = scmp.eq.s32.totalorder %s25, 0
      %p180 = por %p178, %p179
      %p181 = scmp.ne.s32.totalorder %s170, %s173
      %p182 = scmp.eq.s32.totalorder %s30, 1
      %p183 = por %p181, %p182
      %p184 = scmp.ne.s32.totalorder %s173, %s174
      %p185 = scmp.eq.s32.totalorder %s30, 0
      %p186 = por %p184, %p185
      %p187 = scmp.ne.s32.totalorder %s173, %s174
      %p188 = scmp.eq.s32.totalorder %s31, 1
      %p189 = por %p187, %p188
      %p191 = scmp.ne.s32.totalorder %s174, %s190
      %p192 = scmp.eq.s32.totalorder %s31, 0
      %p193 = por %p191, %p192
      %s194 = ssub.s32 %s34, %s43
      %s195 = ssub.s32 %s32, %s51
      %s196 = sor.u32 %s194, %s195
      %s197 = ssub.s32 %s33, %s47
      %s198 = sor.u32 %s196, %s197
      %p199 = scmp.eq.s32.totalorder %s198, 0
      %s201 = sadd.s32 %s200, 1
      %s202 = scalar_select %p199, %s200, %s201
      %p205 = pneg %p199
      %p206 = scmp.eq.s32.totalorder %s25, 1
      %p207 = por %p205, %p206
      %p208 = scmp.ne.s32.totalorder %s200, %s203
      %p209 = scmp.eq.s32.totalorder %s25, 0
      %p210 = por %p208, %p209
      %p211 = scmp.ne.s32.totalorder %s200, %s203
      %p212 = scmp.eq.s32.totalorder %s30, 1
      %p213 = por %p211, %p212
      %p214 = scmp.ne.s32.totalorder %s203, %s204
      %p215 = scmp.eq.s32.totalorder %s30, 0
      %p216 = por %p214, %p215
      %p217 = scmp.ne.s32.totalorder %s203, %s204
      %p218 = scmp.eq.s32.totalorder %s31, 1
      %p219 = por %p217, %p218
      %p221 = scmp.ne.s32.totalorder %s204, %s220
      %p222 = scmp.eq.s32.totalorder %s31, 0
      %p223 = por %p221, %p222
      %p224 = scmp.le.s32.totalorder 1, %s25
      %p225 = scmp.lt.s32.totalorder %s25, 3
      %p226 = pnand %p224, %p225
      %p227 = pneg %p226
      // Predicated region
      $region9: #{tpu_custom_call.1} parent=5 // pred_check
        _
      $region10: #{tpu_custom_call.1} parent=5 // pred_check_branch
        %229 = sbr.rel (%p226) target = $region12
      $region11: #{tpu_custom_call.1} parent=5 // pred_region
        %s230 = ssub.s32 %s25, 1
        // Predicated region
        $region13: #{tpu_custom_call.1} parent=11 // pred_check
          %p231 = pneg %p128
        $region14: #{tpu_custom_call.1} parent=11 // pred_check_branch
          %233 = sbr.rel (%p231) target = $region16
        $region15: #{tpu_custom_call.1} parent=11 // pred_region
          %s235 = ssub.s32 512, 512
          %236 = vsyncadd [#allocation6], %s235
          %s237 = sadd.s32 %s36, %s35
          %s238 = smul.addr %s237, 128
          %s239 = scalar_lea.hbm %s2, %s238
          %s240 = sshll.u32 [#allocation7], 4
          %s241 = int_to_ptr.vmem [resolvable:$true] %s240
          %246 = dma.hbm_to_vmem [thread:$0]  %s239, 512, %s241, [#allocation6], 128, 128, 8
        $region16: #{tpu_custom_call.1} parent=11 // pred_fallthru
          _
        // Predicated region
        $region17: #{tpu_custom_call.1} parent=11 // pred_check
          %p247 = pneg %p156
        $region18: #{tpu_custom_call.1} parent=11 // pred_check_branch
          %249 = sbr.rel (%p247) target = $region20
        $region19: #{tpu_custom_call.1} parent=11 // pred_region
          %s251 = ssub.s32 512, 512
          %252 = vsyncadd [#allocation9], %s251
          %s253 = sadd.s32 %s36, %s35
          %s254 = smul.addr %s253, 128
          %s255 = scalar_lea.hbm %s3, %s254
          %s256 = sshll.u32 [#allocation8], 4
          %s257 = int_to_ptr.vmem [resolvable:$true] %s256
          %262 = dma.hbm_to_vmem [thread:$0]  %s255, 512, %s257, [#allocation9], 128, 128, 8
        $region20: #{tpu_custom_call.1} parent=11 // pred_fallthru
          _
      $region12: #{tpu_custom_call.1} parent=5 // pred_fallthru
        _
      %p263 = scmp.lt.s32.totalorder %s25, 2
      // Predicated region
      $region21: #{tpu_custom_call.1} parent=5 // pred_check
        %p264 = pneg %p263
      $region22: #{tpu_custom_call.1} parent=5 // pred_check_branch
        %266 = sbr.rel (%p264) target = $region24
      $region23: #{tpu_custom_call.1} parent=5 // pred_region
        // Predicated region
        $region25: #{tpu_custom_call.1} parent=23 // pred_check
          %p267 = pneg %p66
        $region26: #{tpu_custom_call.1} parent=23 // pred_check_branch
          %269 = sbr.rel (%p267) target = $region28
        $region27: #{tpu_custom_call.1} parent=23 // pred_region
          %s270 = sand.u32 %s56, 1
          %s271 = scalar_lea.sflag [#allocation3], %s270
          %s272 = sand.u32 %s56, 1
          %s273 = smul.addr %s272, 4
          %s274 = scalar_lea.vmem [#allocation2], %s273
          %s276 = ssub.s32 64, 64
          %277 = vsyncadd %s271, %s276
          %s278 = sadd.s32 %s33, %s34
          %s279 = smul.addr %s278, 64
          %s280 = scalar_lea.hbm %s0, %s279
          %s282 = sshll.u32 %s274, 4
          %s283 = int_to_ptr.vmem [resolvable:$true] %s282
          %285 = dma.hbm_to_vmem [thread:$0]  %s280, 64, %s283, %s271
        $region28: #{tpu_custom_call.1} parent=23 // pred_fallthru
          _
        // Predicated region
        $region29: #{tpu_custom_call.1} parent=23 // pred_check
          %p286 = pneg %p94
        $region30: #{tpu_custom_call.1} parent=23 // pred_check_branch
          %288 = sbr.rel (%p286) target = $region32
        $region31: #{tpu_custom_call.1} parent=23 // pred_region
          %s289 = sand.u32 %s25, 1
          %s290 = scalar_lea.sflag [#allocation6], %s289
          %s291 = sand.u32 %s84, 1
          %s292 = smul.addr %s291, 4
          %s293 = scalar_lea.vmem [#allocation5], %s292
          %s295 = ssub.s32 64, 64
          %296 = vsyncadd %s290, %s295
          %s297 = sadd.s32 %s33, %s34
          %s298 = smul.addr %s297, 64
          %s299 = scalar_lea.hbm %s1, %s298
          %s301 = sshll.u32 %s293, 4
          %s302 = int_to_ptr.vmem [resolvable:$true] %s301
          %304 = dma.hbm_to_vmem [thread:$0]  %s299, 64, %s302, %s290
        $region32: #{tpu_custom_call.1} parent=23 // pred_fallthru
          _
      $region24: #{tpu_custom_call.1} parent=5 // pred_fallthru
        _
      %p305 = scmp.le.s32.totalorder 1, %s25
      %p306 = scmp.lt.s32.totalorder %s25, 3
      %p307 = pnand %p305, %p306
      %p308 = pneg %p307
      // Predicated region
      $region33: #{tpu_custom_call.1} parent=5 // pred_check
        _
      $region34: #{tpu_custom_call.1} parent=5 // pred_check_branch
        %310 = sbr.rel (%p307) target = $region36
      $region35: #{tpu_custom_call.1} parent=5 // pred_region
        %s311 = ssub.s32 %s25, 1
        %s312 = sand.u32 %s59, 1
        %s313 = scalar_lea.sflag [#allocation3], %s312
        %s314 = sand.u32 %s59, 1
        %s315 = smul.addr %s314, 4
        %s316 = scalar_lea.vmem [#allocation2], %s315
        // Predicated region
        $region37: #{tpu_custom_call.1} parent=35 // pred_check
          %p317 = pneg %p72
        $region38: #{tpu_custom_call.1} parent=35 // pred_check_branch
          %319 = sbr.rel (%p317) target = $region40
        $region39: #{tpu_custom_call.1} parent=35 // pred_region
          %320 = dma.done %s313, 64
        $region40: #{tpu_custom_call.1} parent=35 // pred_fallthru
          _
        %s321 = sand.u32 %s30, 1
        %s322 = scalar_lea.sflag [#allocation6], %s321
        %s323 = sand.u32 %s87, 1
        %s324 = smul.addr %s323, 4
        %s325 = scalar_lea.vmem [#allocation5], %s324
        // Predicated region
        $region41: #{tpu_custom_call.1} parent=35 // pred_check
          %p326 = pneg %p100
        $region42: #{tpu_custom_call.1} parent=35 // pred_check_branch
          %328 = sbr.rel (%p326) target = $region44
        $region43: #{tpu_custom_call.1} parent=35 // pred_region
          %329 = dma.done %s322, 64
        $region44: #{tpu_custom_call.1} parent=35 // pred_fallthru
          _
        // Predicated region
        $region45: #{tpu_custom_call.1} parent=35 // pred_check
          %p330 = pneg %p128
        $region46: #{tpu_custom_call.1} parent=35 // pred_check_branch
          %332 = sbr.rel (%p330) target = $region48
        $region47: #{tpu_custom_call.1} parent=35 // pred_region
          %333 = dma.done [#allocation6], 512
        $region48: #{tpu_custom_call.1} parent=35 // pred_fallthru
          _
        // Predicated region
        $region49: #{tpu_custom_call.1} parent=35 // pred_check
          %p334 = pneg %p156
        $region50: #{tpu_custom_call.1} parent=35 // pred_check_branch
          %336 = sbr.rel (%p334) target = $region52
        $region51: #{tpu_custom_call.1} parent=35 // pred_region
          %337 = dma.done [#allocation9], 512
        $region52: #{tpu_custom_call.1} parent=35 // pred_fallthru
          _
        %s338 = sand.u32 %s59, 1
        %s339 = scalar_lea.sflag [#allocation3], %s338
        %s340 = sand.u32 %s59, 1
        %s341 = smul.addr %s340, 4
        %s342 = scalar_lea.vmem [#allocation2], %s341
        %p343 = pneg %p72
        %p344 = pneg %p69
        %s345 = sand.u32 %s30, 1
        %s346 = scalar_lea.sflag [#allocation6], %s345
        %s347 = sand.u32 %s87, 1
        %s348 = smul.addr %s347, 4
        %s349 = scalar_lea.vmem [#allocation5], %s348
        %p350 = pneg %p100
        %p351 = pneg %p97
        %p352 = pneg %p128
        %p353 = pneg %p125
        %p354 = pneg %p156
        %p355 = pneg %p153
        %p356 = pneg %p186
        %p357 = pneg %p183
        %s358 = sand.u32 %s173, 1
        %s359 = scalar_lea.sflag [#allocation4], %s358
        %s360 = sand.u32 %s173, 1
        %s361 = smul.addr %s360, 8
        %s362 = scalar_lea.vmem [#allocation10], %s361
        %p363 = pneg %p216
        %p364 = pneg %p213
        %s365 = sand.u32 %s203, 1
        %s366 = scalar_lea.sflag [#allocation12], %s365
        %s367 = sand.u32 %s203, 1
        %s368 = smul.addr %s367, 8
        %s369 = scalar_lea.vmem [#allocation11], %s368
        %v370 = vld [vmem:[%s316] sm:$0x1]
        %v371 = vld [vmem:[%s325] sm:$0x1]
        %v372 = vld [vmem:[#allocation7] sm:$0xff]
        %v373 = vld [vmem:[#allocation8] sm:$0xff]
        %v374 = vlaneseq
        %v375 = vshrl.u32 %v374, 7
        %v376 = vsub.s32 0, %v375
        %v377 = vrot.slane %v370, %v376
        %v378 = vmul.f32 %v377, %v372
        %v379 = vlaneseq
        %v380 = vshrl.u32 %v379, 7
        %v381 = vsub.s32 0, %v380
        %v382 = vrot.slane %v371, %v381
        %v383 = vmul.f32 %v382, %v373
        %v384 = vsub.f32 %v378, %v383
        %v385 = vadd.f32 %v384, 0.0
        %v386 = vmul.f32 %v377, %v373
        %v387 = vmul.f32 %v382, %v372
        %v388 = vadd.f32 %v386, %v387
        %v389 = vadd.f32 %v388, 0.0
        %v390 = vld [vmem:[%s316 + $0x1] sm:$0x1]
        %v391 = vld [vmem:[%s325 + $0x1] sm:$0x1]
        %s392 = scalar_lea.vmem [#allocation7], 8
        %v393 = vld [vmem:[%s392] sm:$0xff]
        %s394 = scalar_lea.vmem [#allocation8], 8
        %v395 = vld [vmem:[%s394] sm:$0xff]
        %v396 = vlaneseq
        %v397 = vshrl.u32 %v396, 7
        %v398 = vsub.s32 0, %v397
        %v399 = vrot.slane %v390, %v398
        %v400 = vmul.f32 %v399, %v393
        %v401 = vlaneseq
        %v402 = vshrl.u32 %v401, 7
        %v403 = vsub.s32 0, %v402
        %v404 = vrot.slane %v391, %v403
        %v405 = vmul.f32 %v404, %v395
        %v406 = vsub.f32 %v400, %v405
        %v407 = vadd.f32 %v385, %v406
        %v408 = vmul.f32 %v399, %v395
        %v409 = vmul.f32 %v404, %v393
        %v410 = vadd.f32 %v408, %v409
        %v411 = vadd.f32 %v389, %v410
        %v412 = vld [vmem:[%s316 + $0x2] sm:$0x1]
        %v413 = vld [vmem:[%s325 + $0x2] sm:$0x1]
        %s414 = scalar_lea.vmem [#allocation7], 16
        %v415 = vld [vmem:[%s414] sm:$0xff]
        %s416 = scalar_lea.vmem [#allocation8], 16
        %v417 = vld [vmem:[%s416] sm:$0xff]
        %v418 = vlaneseq
        %v419 = vshrl.u32 %v418, 7
        %v420 = vsub.s32 0, %v419
        %v421 = vrot.slane %v412, %v420
        %v422 = vmul.f32 %v421, %v415
        %v423 = vlaneseq
        %v424 = vshrl.u32 %v423, 7
        %v425 = vsub.s32 0, %v424
        %v426 = vrot.slane %v413, %v425
        %v427 = vmul.f32 %v426, %v417
        %v428 = vsub.f32 %v422, %v427
        %v429 = vadd.f32 %v407, %v428
        %v430 = vmul.f32 %v421, %v417
        %v431 = vmul.f32 %v426, %v415
        %v432 = vadd.f32 %v430, %v431
        %v433 = vadd.f32 %v411, %v432
        %v434 = vld [vmem:[%s316 + $0x3] sm:$0x1]
        %v435 = vld [vmem:[%s325 + $0x3] sm:$0x1]
        %s436 = scalar_lea.vmem [#allocation7], 24
        %v437 = vld [vmem:[%s436] sm:$0xff]
        %s438 = scalar_lea.vmem [#allocation8], 24
        %v439 = vld [vmem:[%s438] sm:$0xff]
        %v440 = vlaneseq
        %v441 = vshrl.u32 %v440, 7
        %v442 = vsub.s32 0, %v441
        %v443 = vrot.slane %v434, %v442
        %v444 = vmul.f32 %v443, %v437
        %v445 = vlaneseq
        %v446 = vshrl.u32 %v445, 7
        %v447 = vsub.s32 0, %v446
        %v448 = vrot.slane %v435, %v447
        %v449 = vmul.f32 %v448, %v439
        %v450 = vsub.f32 %v444, %v449
        %v451 = vadd.f32 %v429, %v450
        %v452 = vmul.f32 %v443, %v439
        %v453 = vmul.f32 %v448, %v437
        %v454 = vadd.f32 %v452, %v453
        %v455 = vadd.f32 %v433, %v454
        %456 = vst [vmem:[%s362] sm:$0xff] %v451
        %457 = vst [vmem:[%s369] sm:$0xff] %v455
        %s458 = sand.u32 %s173, 1
        %s459 = scalar_lea.sflag [#allocation4], %s458
        %s460 = sand.u32 %s173, 1
        %s461 = smul.addr %s460, 8
        %s462 = scalar_lea.vmem [#allocation10], %s461
        %s463 = sand.u32 %s203, 1
        %s464 = scalar_lea.sflag [#allocation12], %s463
        %s465 = sand.u32 %s203, 1
        %s466 = smul.addr %s465, 8
        %s467 = scalar_lea.vmem [#allocation11], %s466
        // Predicated region
        $region53: #{tpu_custom_call.1} parent=35 // pred_check
          %p468 = pneg %p183
        $region54: #{tpu_custom_call.1} parent=35 // pred_check_branch
          %470 = sbr.rel (%p468) target = $region56
        $region55: #{tpu_custom_call.1} parent=35 // pred_region
          %s472 = ssub.s32 128, 128
          %473 = vsyncadd %s459, %s472
          %s474 = sadd.s32 %s36, %s35
          %s475 = sadd.s32 %s474, %s37
          %s476 = smul.addr %s475, 128
          %s477 = scalar_lea.hbm %s4, %s476
          %s479 = sshll.u32 %s462, 4
          %s480 = int_to_ptr.vmem [resolvable:$true] %s479
          %482 = dma.vmem_to_hbm [thread:$0]  %s480, 128, %s477, %s459
        $region56: #{tpu_custom_call.1} parent=35 // pred_fallthru
          _
        // Predicated region
        $region57: #{tpu_custom_call.1} parent=35 // pred_check
          %p483 = pneg %p213
        $region58: #{tpu_custom_call.1} parent=35 // pred_check_branch
          %485 = sbr.rel (%p483) target = $region60
        $region59: #{tpu_custom_call.1} parent=35 // pred_region
          %s487 = ssub.s32 128, 128
          %488 = vsyncadd %s464, %s487
          %s489 = sadd.s32 %s36, %s35
          %s490 = sadd.s32 %s489, %s37
          %s491 = smul.addr %s490, 128
          %s492 = scalar_lea.hbm %s5, %s491
          %s494 = sshll.u32 %s467, 4
          %s495 = int_to_ptr.vmem [resolvable:$true] %s494
          %497 = dma.vmem_to_hbm [thread:$0]  %s495, 128, %s492, %s464
        $region60: #{tpu_custom_call.1} parent=35 // pred_fallthru
          _
      $region36: #{tpu_custom_call.1} parent=5 // pred_fallthru
        _
      %p498 = scmp.le.s32.totalorder 2, %s25
      // Predicated region
      $region61: #{tpu_custom_call.1} parent=5 // pred_check
        %p499 = pneg %p498
      $region62: #{tpu_custom_call.1} parent=5 // pred_check_branch
        %501 = sbr.rel (%p499) target = $region64
      $region63: #{tpu_custom_call.1} parent=5 // pred_region
        %s502 = ssub.s32 %s25, 2
        // Predicated region
        $region65: #{tpu_custom_call.1} parent=63 // pred_check
          %p503 = pneg %p189
        $region66: #{tpu_custom_call.1} parent=63 // pred_check_branch
          %505 = sbr.rel (%p503) target = $region68
        $region67: #{tpu_custom_call.1} parent=63 // pred_region
          %s506 = sand.u32 %s174, 1
          %s507 = scalar_lea.sflag [#allocation4], %s506
          %s508 = sand.u32 %s174, 1
          %s509 = smul.addr %s508, 8
          %s510 = scalar_lea.vmem [#allocation10], %s509
          %511 = dma.done %s507, 128
        $region68: #{tpu_custom_call.1} parent=63 // pred_fallthru
          _
        // Predicated region
        $region69: #{tpu_custom_call.1} parent=63 // pred_check
          %p512 = pneg %p219
        $region70: #{tpu_custom_call.1} parent=63 // pred_check_branch
          %514 = sbr.rel (%p512) target = $region72
        $region71: #{tpu_custom_call.1} parent=63 // pred_region
          %s515 = sand.u32 %s204, 1
          %s516 = scalar_lea.sflag [#allocation12], %s515
          %s517 = sand.u32 %s204, 1
          %s518 = smul.addr %s517, 8
          %s519 = scalar_lea.vmem [#allocation11], %s518
          %520 = dma.done %s516, 128
        $region72: #{tpu_custom_call.1} parent=63 // pred_fallthru
          _
      $region64: #{tpu_custom_call.1} parent=5 // pred_fallthru
        _
    $region6: #{tpu_custom_call.1} parent=1 // loop_footer
      %s29 = sadd.s32 1, %s25
    $region7: #{tpu_custom_call.1} parent=1 // loop_footer_branch
      %24 = sbr.rel target = $region3
    $region8: #{tpu_custom_call.1} parent=1 // loop_exit
      _
    %521 = vsyncpa [#allocation3], 1
    %s522 = scalar_lea.sflag [#allocation3], 1
    %523 = vsyncpa %s522, 1
    %524 = vsyncpa [#allocation6], 1
    %s525 = scalar_lea.sflag [#allocation6], 1
    %526 = vsyncpa %s525, 1
    %527 = vsyncpa [#allocation9], 1
    %528 = vsyncpa [#allocation4], 1
    %s529 = scalar_lea.sflag [#allocation4], 1
    %530 = vsyncpa %s529, 1
    %531 = vsyncpa [#allocation12], 1
    %s532 = scalar_lea.sflag [#allocation12], 1
    %533 = vsyncpa %s532, 1

</llo_original>
